<compile_context>
chip_gen: v5e
topology: v5e:2x2
jax: 0.10.0
libtpu: 0.0.40
codegen_flags: <defaults>
</compile_context>

<pallas_src>
from functools import partial

import jax
import jax.numpy as jnp
from jax.experimental import pallas as pl
from jax.experimental.pallas import tpu as pltpu


_LANES = 512                  # lane-dense width (multiple of 128 -> unmasked full-lane stores)
_MAX_TILE_BYTES = 2 << 20     # 2 MiB per tile -> ~8 MiB double-buffered in+out (fits v5e default)
_TARGET_STEPS = 8             # aim for >= ~8 grid steps so the pipeline overlaps DMA & compute


def _round_up(v, m):
    return (v + m - 1) // m * m


def _envelope_kernel(x_ref, o_ref, *, p, a, b, c):
    # x_ref / o_ref: (tile_rows, _LANES), lane-dense.
    x = x_ref[...].astype(jnp.float32)           # compute in f32 (v5e has no bf16 VPU/EUP)
    inv_x = pl.reciprocal(x, approx=False)       # EUP slot; keeps the divide off the VALU
    x_pow_p0 = x ** (p - 1)                      # integer_pow -> square/multiply chain
    x_pow_p1 = x_pow_p0 * x
    x_pow_p2 = x_pow_p1 * x
    env = inv_x + a * x_pow_p0 + b * x_pow_p1 + c * x_pow_p2
    o_ref[...] = jnp.where(x < 1.0, env, 0.0).astype(o_ref.dtype)


def _envelope_2d(x2d, *, p, a, b, c):
    """Run the Pallas kernel on a (rows, _LANES) lane-dense array."""
    rows = x2d.shape[0]
    dtype = x2d.dtype
    itemsize = jnp.dtype(dtype).itemsize
    sublane = max(8, 32 // itemsize)                     # 8 f32 / 16 bf16 / 32 int8
    budget_itemsize = max(itemsize, 4)                   # f32 intermediates inside the kernel
    max_rows = max(sublane,
                   (_MAX_TILE_BYTES // (_LANES * budget_itemsize)) // sublane * sublane)

    if rows <= sublane:
        tile_rows = rows                                 # full-extent block (allowed by (8,128) rule)
    else:
        tile_rows = _round_up(pl.cdiv(rows, _TARGET_STEPS), sublane)
        tile_rows = min(tile_rows, max_rows)
    grid = pl.cdiv(rows, tile_rows)                      # partial last block is masked by Pallas

    kernel = partial(_envelope_kernel, p=p, a=a, b=b, c=c)
    return pl.pallas_call(
        kernel,
        out_shape=jax.ShapeDtypeStruct((rows, _LANES), dtype),
        grid_spec=pltpu.PrefetchScalarGridSpec(
            num_scalar_prefetch=0,
            grid=(grid,),
            in_specs=[pl.BlockSpec((tile_rows, _LANES), lambda i: (i, 0))],
            out_specs=pl.BlockSpec((tile_rows, _LANES), lambda i: (i, 0)),
        ),
        compiler_params=pltpu.CompilerParams(
            dimension_semantics=("parallel",)),
    )(x2d)


def _envelope_jnp(x, p, a, b, c):
    """Tiny pure-JAX epilogue for the <_LANES tail (same numerics as the kernel)."""
    xf = x.astype(jnp.float32)
    x0 = xf ** (p - 1)
    x1 = x0 * xf
    x2 = x1 * xf
    env = 1.0 / xf + a * x0 + b * x1 + c * x2
    return jnp.where(xf < 1.0, env, 0.0).astype(x.dtype)


def envelope(x, exponent=5):
    """Pallas TPU implementation of Envelope.forward; works on any input shape."""
    p = exponent + 1
    a = -(p + 1) * (p + 2) / 2
    b = p * (p + 2)
    c = -p * (p + 1) / 2

    orig_shape = x.shape
    n = int(x.size)
    flat = x.reshape(-1)                                  # metadata-only reshape
    if n == 0:
        return flat.reshape(orig_shape)

    n_main = (n // _LANES) * _LANES
    pieces = []
    if n_main > 0:
        x_main = flat if n_main == n else flat[:n_main]
        x2d = x_main.reshape(n_main // _LANES, _LANES)    # zero-copy repack, lane-dense
        out2d = _envelope_2d(x2d, p=p, a=a, b=b, c=c)
        pieces.append(out2d.reshape(-1))
    if n_main < n:
        # <512-element tail: pure-JAX epilogue, cheaper than padding / slicing
        # the whole array around the pallas_call fusion barrier.
        pieces.append(_envelope_jnp(flat[n_main:], p, a, b, c))

    out_flat = pieces[0] if len(pieces) == 1 else jnp.concatenate(pieces)
    return out_flat.reshape(orig_shape)


def envelope_ref(x, exponent=5):
    """Pure-JAX reference matching the PyTorch Envelope module."""
    p = exponent + 1
    a = -(p + 1) * (p + 2) / 2
    b = p * (p + 2)
    c = -p * (p + 1) / 2
    x0 = x ** (p - 1)
    x1 = x0 * x
    x2 = x1 * x
    return (1.0 / x + a * x0 + b * x1 + c * x2) * (x < 1.0).astype(x.dtype)


if __name__ == "__main__":
    exponent = 5
    key = jax.random.PRNGKey(0)
    k1, k2 = jax.random.split(key)

    # Typical usage: x = dist / cutoff with shape (num_edges, 1); keep x > 0 to
    # avoid the 1/x singularity (same as the PyTorch module) and include values
    # above 1 to exercise the (x < 1) mask.
    x1 = jax.random.uniform(k1, (512, 1), dtype=jnp.float32, minval=0.05, maxval=1.5)
    # Non-multiple-of-512 size exercises the kernel-prefix + JAX-tail path.
    x2 = jax.random.uniform(k2, (1000,), dtype=jnp.float32, minval=0.05, maxval=1.5)

    out1 = jax.block_until_ready(envelope(x1, exponent=exponent))
    out2 = jax.block_until_ready(envelope(x2, exponent=exponent))

    ref1 = envelope_ref(x1, exponent=exponent)
    ref2 = envelope_ref(x2, exponent=exponent)

    assert out1.shape == x1.shape and out2.shape == x2.shape
    assert jnp.allclose(out1, ref1, atol=1e-5, rtol=1e-5), "mismatch vs reference (x1)"
    assert jnp.allclose(out2, ref2, atol=1e-5, rtol=1e-5), "mismatch vs reference (x2)"

    print("KERNEL_OK")
</pallas_src>

<mosaic_0001>
module attributes {stable_mosaic.version = 11 : i64} {
  func.func @_envelope_kernel(%arg0: i32, %arg1: memref<1x512xf32, #tpu.memory_space<vmem>>, %arg2: memref<1x512xf32, #tpu.memory_space<vmem>>) attributes {dimension_semantics = [#tpu.dimension_semantics<parallel>], iteration_bounds = array<i64: 1>, scalar_prefetch = 0 : i64, scratch_operands = 0 : i64, tpu.core_type = #tpu.core_type<tc>, window_params = [{transform_indices = @transform_0, window_bounds = array<i64: 1, 512>}, {transform_indices = @transform_1, window_bounds = array<i64: 1, 512>}]} {
    %c0 = arith.constant 0 : index
    %c0_0 = arith.constant 0 : index
    %0 = vector.load %arg1[%c0, %c0_0] : memref<1x512xf32, #tpu.memory_space<vmem>>, vector<1x512xf32>
    %1 = tpu.reciprocal %0 : vector<1x512xf32> -> vector<1x512xf32>
    %2 = arith.mulf %0, %0 : vector<1x512xf32>
    %3 = arith.mulf %2, %2 : vector<1x512xf32>
    %4 = arith.mulf %0, %3 : vector<1x512xf32>
    %5 = arith.mulf %4, %0 : vector<1x512xf32>
    %6 = arith.mulf %5, %0 : vector<1x512xf32>
    %cst = arith.constant -2.800000e+01 : f32
    %7 = vector.broadcast %cst : f32 to vector<1x512xf32>
    %8 = arith.mulf %7, %4 : vector<1x512xf32>
    %9 = arith.addf %1, %8 : vector<1x512xf32>
    %cst_1 = arith.constant 4.800000e+01 : f32
    %10 = vector.broadcast %cst_1 : f32 to vector<1x512xf32>
    %11 = arith.mulf %10, %5 : vector<1x512xf32>
    %12 = arith.addf %9, %11 : vector<1x512xf32>
    %cst_2 = arith.constant -2.100000e+01 : f32
    %13 = vector.broadcast %cst_2 : f32 to vector<1x512xf32>
    %14 = arith.mulf %13, %6 : vector<1x512xf32>
    %15 = arith.addf %12, %14 : vector<1x512xf32>
    %cst_3 = arith.constant 1.000000e+00 : f32
    %16 = vector.broadcast %cst_3 : f32 to vector<1x512xf32>
    %17 = arith.cmpf olt, %0, %16 : vector<1x512xf32>
    %cst_4 = arith.constant 0.000000e+00 : f32
    %18 = vector.broadcast %cst_4 : f32 to vector<1x512xf32>
    %19 = arith.select %17, %15, %18 : vector<1x512xi1>, vector<1x512xf32>
    %c0_5 = arith.constant 0 : index
    %c0_6 = arith.constant 0 : index
    %20 = vector.load %arg2[%c0_5, %c0_6] : memref<1x512xf32, #tpu.memory_space<vmem>>, vector<1x512xf32>
    tpu.vector_store %arg2[%c0_5, %c0_6], %19 {strides = array<i32>} : memref<1x512xf32, #tpu.memory_space<vmem>>, vector<1x512xf32>,
    return
  }
  func.func @transform_0(%arg0: i32) -> (i32, i32) {
    %c0_i32 = arith.constant 0 : i32
    %c0_i32_0 = arith.constant 0 : i32
    return %arg0, %c0_i32 : i32, i32
  }
  func.func @transform_1(%arg0: i32) -> (i32, i32) {
    %c0_i32 = arith.constant 0 : i32
    %c0_i32_0 = arith.constant 0 : i32
    return %arg0, %c0_i32 : i32, i32
  }
}

</mosaic_0001>

<llo_original>
// kernel: tpu_custom_call.1
$region0: #{tpu_custom_call.1}
  #allocation0 [shape = 'u32[]', space=smem, size = 0x4, offset = 0x4, fixed_abs, tag = 'smem constant byte address 0x4 - core index']
  #allocation1 [shape = 'u32[72,128]{1,0:T(1,128)}', space=vmem, size = 0x9000, scoped, tag = 'internal scratch']
  %s0 = inlined_call_operand.hbm [shape: f32[1,512], index: 0, kind: input, shape index: {}]
  %s1 = inlined_call_operand.hbm [shape: f32[1,512], index: 1, kind: output, shape index: {}]
  %s2 = sld [smem:[#allocation0]]
  $region18: #{tpu_custom_call.1} parent=0
    _
  %s4 = ssub.s32 1, %s2
  %s5 = scalar_select 0, %s4, %s2
  $region1: #{tpu_custom_call.1} parent=0
    #allocation2 [shape = 'u8[2048]{0}', space=vmem, size = 0x800, scoped, tag = 'input window, operand 0, single buffered']
    #allocation3 [shape = 's32[1]{0}', space=sflag, size = 0x4, scoped, tag = 'scoped memory for tpu_custom_call.1']
    #allocation4 [shape = 's32[1]{0}', space=sflag, size = 0x4, scoped, tag = 'scoped memory for tpu_custom_call.1']
    #allocation5 [shape = 'u8[2048]{0}', space=vmem, size = 0x800, scoped, tag = 'output window, operand 0, single buffered']
    %6 = vsyncpa [#allocation3], 0
    %7 = vsyncpa [#allocation4], 0
    // Predicated region
    $region2: #{tpu_custom_call.1} parent=1 // pred_check
      _
    $region3: #{tpu_custom_call.1} parent=1 // pred_check_branch
      %9 = sbr.rel (0) target = $region5
    $region4: #{tpu_custom_call.1} parent=1 // pred_region
      %11 = vsyncadd [#allocation3], 0
      %s13 = sshll.u32 %s0, 4
      %s14 = int_to_ptr.hbm [resolvable:$true] %s13
      %s15 = sshll.u32 [#allocation2], 4
      %s16 = int_to_ptr.vmem [resolvable:$true] %s15
      %18 = dma.hbm_to_vmem [thread:$0]  %s14, 64, %s16, [#allocation3]
    $region5: #{tpu_custom_call.1} parent=1 // pred_fallthru
      _
    // Predicated region
    $region6: #{tpu_custom_call.1} parent=1 // pred_check
      _
    $region7: #{tpu_custom_call.1} parent=1 // pred_check_branch
      %20 = sbr.rel (0) target = $region9
    $region8: #{tpu_custom_call.1} parent=1 // pred_region
      %22 = dma.done [#allocation3], 64
    $region9: #{tpu_custom_call.1} parent=1 // pred_fallthru
      _
    %v23 = vld [vmem:[#allocation2] sm:$0xf]
    %v24 = vrcp.pop %v23
    %v25 = vmul.f32 %v23, %v24
    %v26 = vsub.f32 1.0, %v25
    %v27 = vmul.f32 %v24, %v26
    %v28 = vadd.f32 %v24, %v27
    %vm29 = vweird.f32 %v23
    %vm30 = vweird.f32 %v24
    %vm31 = vmor %vm29, %vm30
    %v32 = vsel %vm31, %v24, %v28
    %v33 = vand.u32 2147483647, %v23
    %vm34 = vcmp.eq.f32.partialorder %v33, 8.507059e+37
    %v35 = vand.u32 %v23, 2147483648
    %v36 = vor.u32 1.1754944e-38, %v35
    %v37 = vsel %vm34, %v36, %v32
    %v38 = vmul.f32 %v23, %v23
    %v39 = vmul.f32 %v38, %v38
    %v40 = vmul.f32 %v23, %v39
    %v41 = vmul.f32 %v40, %v23
    %v42 = vmul.f32 %v41, %v23
    %v43 = vmul.f32 %v40, -28.0
    %v44 = vadd.f32 %v37, %v43
    %v45 = vmul.f32 %v41, 48.0
    %v46 = vadd.f32 %v44, %v45
    %v47 = vmul.f32 %v42, -21.0
    %v48 = vadd.f32 %v46, %v47
    %vm49 = vcmp.lt.f32.partialorder %v23, 1.0
    %v50 = vsel %vm49, %v48, 0.0
    %v51 = vlaneseq
    %vm52 = vcmp.ge.s32.totalorder %v51, 0
    %vm53 = vcmp.lt.s32.totalorder %v51, 512
    %vm54 = vmand %vm52, %vm53
    %55 = vst.msk [vmem:[#allocation5] sm:$0xf] %vm54, %v50
    // Predicated region
    $region10: #{tpu_custom_call.1} parent=1 // pred_check
      _
    $region11: #{tpu_custom_call.1} parent=1 // pred_check_branch
      %57 = sbr.rel (0) target = $region13
    $region12: #{tpu_custom_call.1} parent=1 // pred_region
      %59 = vsyncadd [#allocation4], 0
      %s61 = sshll.u32 [#allocation5], 4
      %s62 = int_to_ptr.vmem [resolvable:$true] %s61
      %s63 = sshll.u32 %s1, 4
      %s64 = int_to_ptr.hbm [resolvable:$true] %s63
      %66 = dma.vmem_to_hbm [thread:$0]  %s62, 64, %s64, [#allocation4]
    $region13: #{tpu_custom_call.1} parent=1 // pred_fallthru
      _
    // Predicated region
    $region14: #{tpu_custom_call.1} parent=1 // pred_check
      _
    $region15: #{tpu_custom_call.1} parent=1 // pred_check_branch
      %68 = sbr.rel (0) target = $region17
    $region16: #{tpu_custom_call.1} parent=1 // pred_region
      %70 = dma.done [#allocation4], 64
    $region17: #{tpu_custom_call.1} parent=1 // pred_fallthru
      _
    %71 = vsyncpa [#allocation3], 1
    %72 = vsyncpa [#allocation4], 1

</llo_original>
